<compile_context>
chip_gen: v7x
topology: tpu7x:2x2x1
jax: 0.10.0
libtpu: 0.0.40
codegen_flags: <defaults>
</compile_context>

<pallas_src>
from typing import List, Optional, Tuple

import numpy as np
import jax
import jax.numpy as jnp
from jax.experimental import pallas as pl
from jax.experimental.pallas import tpu as pltpu


# ----------------------------------------------------------------------------
# A tiny synthetic Grammar (the original module takes one at construction).
# Non-terminal ids: 0=S, 1=A, 2=B.  Terminal ids: 10='a', 11='b'.
# ----------------------------------------------------------------------------
class Grammar:
    def __init__(self):
        self.start_id = 0
        self.n_non_terminals = 3
        self._rules: List[Tuple[int, Tuple[int, ...]]] = [
            (0, (1, 2)),      # S -> A B
            (0, (1,)),        # S -> A
            (1, (10, 2)),     # A -> a B
            (1, (10,)),       # A -> a
            (2, (11,)),       # B -> b
            (2, (10, 11)),    # B -> a b
            (2, (11, 1)),     # B -> b A
            (1, (11,)),       # A -> b
        ]

    def rules(self):
        return self._rules

    def is_terminal(self, sym: int) -> bool:
        return sym >= self.n_non_terminals

    def build_non_terminal_rule_matrix(self) -> np.ndarray:
        m = np.zeros((self.n_non_terminals, len(self._rules)), dtype=bool)
        for ri, (lhs, _) in enumerate(self._rules):
            m[lhs, ri] = True
        return m


# ----------------------------------------------------------------------------
# Single-call generation kernel: grid=(1,), lax.while_loop over actions.
# State: h/c in VMEM scratch, expansion stack + stack pointer in SMEM scratch,
# per-action results written to SMEM outputs (read back by the host once).
# ----------------------------------------------------------------------------
def make_tree_generate_kernel(*, emb_dim: int, hid_dim: int, n_rules: int,
                              n_non_terminals: int, max_rhs: int,
                              start_id: int, padding_id: int, max_actions: int):
    E, H, R, NT = emb_dim, hid_dim, n_rules, n_non_terminals
    MAX_RHS = max_rhs
    STACK_CAP = max_actions * MAX_RHS + 8
    NEG = -1e9

    def kernel(rlen_ref, rrhs_ref,                          # scalar prefetch (SMEM)
               z_ref, tpar_ref, tcur_ref, whh_ref,          # VMEM inputs (resident)
               wrule_ref, brule_ref, rlhs_ref,
               lhs_out, par_out, rule_out, cnt_out,         # SMEM outputs
               h_scr, c_scr, rid_scr,                       # VMEM scratch
               sym_stk, par_stk, sp_scr):                   # SMEM scratch (stack)

        # ---- one-time init (single grid step, no pl.program_id needed) ----
        h_scr[...] = z_ref[...]
        c_scr[...] = z_ref[...]
        sym_stk[0] = jnp.int32(start_id)
        par_stk[0] = jnp.int32(padding_id)

        def _init_out(t, carry):
            lhs_out[t] = jnp.int32(-1)
            par_out[t] = jnp.int32(-1)
            rule_out[t] = jnp.int32(-1)
            return carry
        jax.lax.fori_loop(0, max_actions, _init_out, jnp.int32(0))

        # ---- loop-invariant values hoisted out of the action loop ----
        whh = whh_ref[...]                                   # (H, 4H) bf16
        wrule = wrule_ref[...]                               # (H, R)  bf16
        brule = brule_ref[...]                               # (1, R)  f32
        rlhs = rlhs_ref[...]                                 # (1, R)  i32 (rule LHS ids)
        lane = jax.lax.broadcasted_iota(jnp.int32, (1, R), 1).astype(jnp.float32)
        lane_pad = jnp.full((1, R), float(R), jnp.float32)
        neg_row = jnp.full((1, R), NEG, jnp.float32)

        def cond(carry):
            step, sp = carry
            return jnp.logical_and(sp > 0, step < max_actions)

        def body(carry):
            step, sp = carry
            idx = sp - 1                       # slot of the popped entry
            cur = sym_stk[idx]
            par = par_stk[idx]
            lhs_out[step] = cur
            par_out[step] = par
            sp_scr[0] = idx                    # terminal case: pop only

            # NOTE: dynamic pl.ds gathers below have no runtime bounds check on
            # TPU VMEM; indices are guaranteed in-range by the grammar tables.
            @pl.when(cur < NT)                 # non-terminal: LSTM step + expand
            def _expand():
                # gates = T_par[par] + T_cur[cur] (+biases folded) + h @ W_hh^T
                t_par = tpar_ref[pl.ds(par, 1), :]           # (1, 4H)
                t_cur = tcur_ref[pl.ds(cur, 1), :]           # (1, 4H)
                hh = jnp.dot(h_scr[...].astype(jnp.bfloat16), whh,
                             preferred_element_type=jnp.float32)
                gates = t_par + t_cur + hh
                i_g = jax.nn.sigmoid(gates[:, 0 * H:1 * H])  # f32 activations
                f_g = jax.nn.sigmoid(gates[:, 1 * H:2 * H])
                g_g = jnp.tanh(gates[:, 2 * H:3 * H])
                o_g = jax.nn.sigmoid(gates[:, 3 * H:4 * H])
                c_new = f_g * c_scr[...] + i_g * g_g
                h_new = o_g * jnp.tanh(c_new)
                h_scr[...] = h_new
                c_scr[...] = c_new

                # rule logits + mask-by-LHS-comparison (no gather, no softmax)
                logits = jnp.dot(h_new.astype(jnp.bfloat16), wrule,
                                 preferred_element_type=jnp.float32) + brule
                masked = jnp.where(rlhs == cur, logits, neg_row)   # (1, R)
                mval = jnp.max(masked, axis=-1, keepdims=True)
                cand = jnp.where(masked >= mval, lane, lane_pad)
                rid_scr[...] = jnp.min(cand, axis=-1,
                                       keepdims=True).astype(jnp.int32)
                rid = rid_scr[0, 0]            # first max index (torch.argmax)
                rule_out[step] = rid

                # push reversed(rhs) with parent = current non-terminal
                rlen = rlen_ref[rid]
                for k in range(MAX_RHS):       # static unroll
                    @pl.when(k < rlen)
                    def _push(k=k):
                        sym_stk[idx + k] = rrhs_ref[rid * MAX_RHS + (rlen - 1 - k)]
                        par_stk[idx + k] = cur
                sp_scr[0] = idx + rlen

            return step + 1, sp_scr[0]

        final_step, _ = jax.lax.while_loop(cond, body,
                                           (jnp.int32(0), jnp.int32(1)))
        cnt_out[0] = final_step

    grid_spec = pltpu.PrefetchScalarGridSpec(
        num_scalar_prefetch=2,                 # rule lengths, flattened RHS table
        grid=(1,),
        in_specs=[
            pl.BlockSpec((1, H), lambda i, *_: (0, 0)),               # z
            pl.BlockSpec((NT + 1, 4 * H), lambda i, *_: (0, 0)),      # T_par
            pl.BlockSpec((NT + 1, 4 * H), lambda i, *_: (0, 0)),      # T_cur (+bias)
            pl.BlockSpec((H, 4 * H), lambda i, *_: (0, 0)),           # W_hh^T bf16
            pl.BlockSpec((H, R), lambda i, *_: (0, 0)),               # W_rule^T bf16
            pl.BlockSpec((1, R), lambda i, *_: (0, 0)),               # b_rule
            pl.BlockSpec((1, R), lambda i, *_: (0, 0)),               # rule LHS ids
        ],
        out_specs=(
            pl.BlockSpec(memory_space=pltpu.MemorySpace.SMEM),        # lhs sequence
            pl.BlockSpec(memory_space=pltpu.MemorySpace.SMEM),        # parent sequence
            pl.BlockSpec(memory_space=pltpu.MemorySpace.SMEM),        # rule ids (-1=None)
            pl.BlockSpec(memory_space=pltpu.MemorySpace.SMEM),        # action count
        ),
        scratch_shapes=[
            pltpu.VMEM((1, H), jnp.float32),          # h
            pltpu.VMEM((1, H), jnp.float32),          # c
            pltpu.VMEM((1, 1), jnp.int32),            # argmax landing pad
            pltpu.SMEM((STACK_CAP,), jnp.int32),      # symbol stack
            pltpu.SMEM((STACK_CAP,), jnp.int32),      # parent stack
            pltpu.SMEM((1,), jnp.int32),              # stack pointer
        ],
    )

    return pl.pallas_call(
        kernel,
        grid_spec=grid_spec,
        out_shape=(
            jax.ShapeDtypeStruct((max_actions,), jnp.int32),
            jax.ShapeDtypeStruct((max_actions,), jnp.int32),
            jax.ShapeDtypeStruct((max_actions,), jnp.int32),
            jax.ShapeDtypeStruct((1,), jnp.int32),
        ),
        compiler_params=pltpu.CompilerParams(
            dimension_semantics=("arbitrary",)),
    )


# ----------------------------------------------------------------------------
# TreeGenerator: parameter setup + single-kernel-call forward.
# ----------------------------------------------------------------------------
class TreeGenerator:
    def __init__(self, grammar: Grammar, emb_dim: int, hid_dim: int, seed: int = 0):
        self.grammar = grammar
        self.rules = grammar.rules()
        self.non_terminal_rules_matrix = np.asarray(
            grammar.build_non_terminal_rule_matrix(), dtype=bool)
        self.n_non_terminals, self.n_rules = self.non_terminal_rules_matrix.shape
        self.padding_id = self.n_non_terminals
        self.emb_dim = emb_dim
        self.hid_dim = hid_dim
        self.max_rhs = max(len(r[1]) for r in self.rules)

        key = jax.random.PRNGKey(seed)
        ks = jax.random.split(key, 7)
        scale = 0.1
        emb = scale * jax.random.normal(ks[0], (self.n_non_terminals + 1, emb_dim),
                                        dtype=jnp.float32)
        # padding_idx row is zeros (torch nn.Embedding padding_idx semantics)
        self.lhs_embedding = emb.at[self.padding_id].set(0.0)

        W_ih = scale * jax.random.normal(ks[1], (4 * hid_dim, 2 * emb_dim), jnp.float32)
        W_hh = scale * jax.random.normal(ks[2], (4 * hid_dim, hid_dim), jnp.float32)
        b_ih = scale * jax.random.normal(ks[3], (4 * hid_dim,), jnp.float32)
        b_hh = scale * jax.random.normal(ks[4], (4 * hid_dim,), jnp.float32)
        W_rule = scale * jax.random.normal(ks[5], (self.n_rules, hid_dim), jnp.float32)
        b_rule = scale * jax.random.normal(ks[6], (self.n_rules,), jnp.float32)

        # Precomputed embedding->gate tables (f32, one row per symbol id);
        # LSTM biases folded into T_cur.  Removes the per-step concat + halves
        # the in-kernel contraction (only h @ W_hh^T is left on the MXU).
        w_ih_par = W_ih[:, :emb_dim]                    # (4H, E)
        w_ih_cur = W_ih[:, emb_dim:]                    # (4H, E)
        self.T_par = self.lhs_embedding @ jnp.transpose(w_ih_par)              # (NT+1, 4H)
        self.T_cur = (self.lhs_embedding @ jnp.transpose(w_ih_cur)
                      + (b_ih + b_hh)[None, :])                                  # (NT+1, 4H)
        self.WhhT_bf16 = jnp.transpose(W_hh).astype(jnp.bfloat16)               # (H, 4H)
        self.WruleT_bf16 = jnp.transpose(W_rule).astype(jnp.bfloat16)           # (H, R)
        self.b_rule = b_rule.reshape(1, self.n_rules)                            # (1, R)

        # Static per-rule LHS ids; mask == (rule_lhs == current_lhs).
        self.rule_lhs = np.array([r[0] for r in self.rules], dtype=np.int32)
        self.rule_lhs_row = jnp.asarray(self.rule_lhs.reshape(1, self.n_rules))

        # Grammar rule table for SMEM: rhs lengths + flattened padded rhs symbols.
        rlen = np.array([len(r[1]) for r in self.rules], dtype=np.int32)
        rrhs = np.zeros((self.n_rules, self.max_rhs), dtype=np.int32)
        for ri, (_, rhs) in enumerate(self.rules):
            rrhs[ri, :len(rhs)] = np.asarray(rhs, dtype=np.int32)
        self.rule_len = jnp.asarray(rlen)
        self.rule_rhs_flat = jnp.asarray(rrhs.reshape(-1))

        self._kernels = {}

    def _get_kernel(self, max_actions: int):
        if max_actions not in self._kernels:
            self._kernels[max_actions] = make_tree_generate_kernel(
                emb_dim=self.emb_dim, hid_dim=self.hid_dim,
                n_rules=self.n_rules, n_non_terminals=self.n_non_terminals,
                max_rhs=self.max_rhs, start_id=self.grammar.start_id,
                padding_id=self.padding_id, max_actions=max_actions)
        return self._kernels[max_actions]

    def forward(self, z: jnp.ndarray, max_actions: Optional[int] = None):
        # TODO(synk): unbounded generation (max_actions=None) has no static bound
        # for the on-device loop; fall back to a fixed cap in that case.
        cap = int(max_actions) if max_actions is not None else 256
        fn = self._get_kernel(cap)
        outs = fn(self.rule_len, self.rule_rhs_flat,
                  z.reshape(1, self.hid_dim).astype(jnp.float32),
                  self.T_par, self.T_cur, self.WhhT_bf16, self.WruleT_bf16,
                  self.b_rule, self.rule_lhs_row)
        outs = jax.block_until_ready(outs)
        lhs_a, par_a, rule_a, cnt = jax.device_get(outs)   # single host readback

        n = int(cnt[0])
        lhs_sequence = [int(v) for v in lhs_a[:n]]
        parent_lhs_sequence = [int(v) for v in par_a[:n]]
        predicted_rules = [None if int(r) < 0 else int(r) for r in rule_a[:n]]
        # Mirror the reference module's assert (predicted rule LHS == current LHS).
        for lhs, r in zip(lhs_sequence, predicted_rules):
            if r is not None:
                assert self.rules[r][0] == lhs
        return lhs_sequence, parent_lhs_sequence, predicted_rules


# ----------------------------------------------------------------------------
# Pure NumPy port of the PyTorch reference loop, using the SAME precomputed
# tables / bf16-rounded weights as the kernel (correctness cross-check only).
# ----------------------------------------------------------------------------
def _bf16(a):
    return np.asarray(jnp.asarray(np.asarray(a, dtype=np.float32))
                      .astype(jnp.bfloat16).astype(jnp.float32))


def reference_forward(model: TreeGenerator, z: np.ndarray, max_actions: int):
    H = model.hid_dim
    t_par = np.asarray(model.T_par, dtype=np.float32)
    t_cur = np.asarray(model.T_cur, dtype=np.float32)
    whh = np.asarray(model.WhhT_bf16.astype(jnp.float32))
    wrule = np.asarray(model.WruleT_bf16.astype(jnp.float32))
    b_rule = np.asarray(model.b_rule, dtype=np.float32)[0]
    rule_lhs = model.rule_lhs

    def sigmoid(v):
        return 1.0 / (1.0 + np.exp(-v))

    h = np.asarray(z, dtype=np.float32).reshape(H).copy()
    c = h.copy()
    par_stack = [model.padding_id]
    sym_stack = [model.grammar.start_id]
    lhs_seq, par_seq, rule_seq = [], [], []
    while sym_stack and len(lhs_seq) < max_actions:
        par = par_stack.pop()
        cur = sym_stack.pop()
        lhs_seq.append(cur)
        par_seq.append(par)
        if model.grammar.is_terminal(cur):
            rule_seq.append(None)
            continue
        gates = t_par[par] + t_cur[cur] + _bf16(h) @ whh
        i_g = sigmoid(gates[0:H]); f_g = sigmoid(gates[H:2 * H])
        g_g = np.tanh(gates[2 * H:3 * H]); o_g = sigmoid(gates[3 * H:4 * H])
        c = f_g * c + i_g * g_g
        h = o_g * np.tanh(c)
        logits = _bf16(h) @ wrule + b_rule
        masked = np.where(rule_lhs == cur, logits, -1e9)   # log_softmax is monotone
        rid = int(np.argmax(masked))
        rule_seq.append(rid)
        for s in reversed(model.rules[rid][1]):
            par_stack.append(cur)
            sym_stack.append(s)
    return lhs_seq, par_seq, rule_seq


if __name__ == "__main__":
    emb_dim, hid_dim = 16, 32
    grammar = Grammar()
    model = TreeGenerator(grammar, emb_dim=emb_dim, hid_dim=hid_dim, seed=0)

    z = jax.random.normal(jax.random.PRNGKey(0), (1, hid_dim), dtype=jnp.float32)
    max_actions = 16

    lhs_seq, par_seq, rules = model.forward(z, max_actions=max_actions)

    assert len(lhs_seq) == len(par_seq) == len(rules)
    assert 0 < len(lhs_seq) <= max_actions
    assert lhs_seq[0] == grammar.start_id and par_seq[0] == model.padding_id

    ref = reference_forward(model, np.asarray(z), max_actions)
    assert (lhs_seq, par_seq, rules) == ref, ((lhs_seq, par_seq, rules), ref)

    print("KERNEL_OK")
</pallas_src>

<mosaic_0001>
module attributes {stable_mosaic.version = 11 : i64} {
  func.func @kernel(%arg0: i32, %arg1: memref<8xi32, #tpu.memory_space<smem>>, %arg2: memref<16xi32, #tpu.memory_space<smem>>, %arg3: memref<1x32xf32, #tpu.memory_space<vmem>>, %arg4: memref<4x128xf32, #tpu.memory_space<vmem>>, %arg5: memref<4x128xf32, #tpu.memory_space<vmem>>, %arg6: memref<32x128xbf16, #tpu.memory_space<vmem>>, %arg7: memref<32x8xbf16, #tpu.memory_space<vmem>>, %arg8: memref<1x8xf32, #tpu.memory_space<vmem>>, %arg9: memref<1x8xi32, #tpu.memory_space<vmem>>, %arg10: memref<16xi32, #tpu.memory_space<smem>>, %arg11: memref<16xi32, #tpu.memory_space<smem>>, %arg12: memref<16xi32, #tpu.memory_space<smem>>, %arg13: memref<1xi32, #tpu.memory_space<smem>>, %arg14: memref<1x32xf32, #tpu.memory_space<vmem>>, %arg15: memref<1x32xf32, #tpu.memory_space<vmem>>, %arg16: memref<1x1xi32, #tpu.memory_space<vmem>>, %arg17: memref<40xi32, #tpu.memory_space<smem>>, %arg18: memref<40xi32, #tpu.memory_space<smem>>, %arg19: memref<1xi32, #tpu.memory_space<smem>>) attributes {dimension_semantics = [#tpu.dimension_semantics<arbitrary>], iteration_bounds = array<i64: 1>, scalar_prefetch = 2 : i64, scratch_operands = 6 : i64, tpu.core_type = #tpu.core_type<tc>, window_params = [{pipeline_mode = #tpu.pipeline_mode<synchronous>, transform_indices = @transform_0, window_bounds = array<i64: 1, 32>}, {pipeline_mode = #tpu.pipeline_mode<synchronous>, transform_indices = @transform_1, window_bounds = array<i64: 4, 128>}, {pipeline_mode = #tpu.pipeline_mode<synchronous>, transform_indices = @transform_2, window_bounds = array<i64: 4, 128>}, {pipeline_mode = #tpu.pipeline_mode<synchronous>, transform_indices = @transform_3, window_bounds = array<i64: 32, 128>}, {pipeline_mode = #tpu.pipeline_mode<synchronous>, transform_indices = @transform_4, window_bounds = array<i64: 32, 8>}, {pipeline_mode = #tpu.pipeline_mode<synchronous>, transform_indices = @transform_5, window_bounds = array<i64: 1, 8>}, {pipeline_mode = #tpu.pipeline_mode<synchronous>, transform_indices = @transform_6, window_bounds = array<i64: 1, 8>}, {transform_indices = @transform_7, window_bounds = array<i64: 16>}, {transform_indices = @transform_8, window_bounds = array<i64: 16>}, {transform_indices = @transform_9, window_bounds = array<i64: 16>}, {transform_indices = @transform_10, window_bounds = array<i64: 1>}]} {
    %c0 = arith.constant 0 : index
    %c0_0 = arith.constant 0 : index
    %0 = vector.load %arg3[%c0, %c0_0] : memref<1x32xf32, #tpu.memory_space<vmem>>, vector<1x32xf32>
    %c0_1 = arith.constant 0 : index
    %c0_2 = arith.constant 0 : index
    %1 = vector.load %arg14[%c0_1, %c0_2] : memref<1x32xf32, #tpu.memory_space<vmem>>, vector<1x32xf32>
    tpu.vector_store %arg14[%c0_1, %c0_2], %0 {strides = array<i32>} : memref<1x32xf32, #tpu.memory_space<vmem>>, vector<1x32xf32>,
    %c0_3 = arith.constant 0 : index
    %c0_4 = arith.constant 0 : index
    %2 = vector.load %arg3[%c0_3, %c0_4] : memref<1x32xf32, #tpu.memory_space<vmem>>, vector<1x32xf32>
    %c0_5 = arith.constant 0 : index
    %c0_6 = arith.constant 0 : index
    %3 = vector.load %arg15[%c0_5, %c0_6] : memref<1x32xf32, #tpu.memory_space<vmem>>, vector<1x32xf32>
    tpu.vector_store %arg15[%c0_5, %c0_6], %2 {strides = array<i32>} : memref<1x32xf32, #tpu.memory_space<vmem>>, vector<1x32xf32>,
    %c0_i32 = arith.constant 0 : i32
    %c0_7 = arith.constant 0 : index
    %4 = memref.load %arg17[%c0_7] : memref<40xi32, #tpu.memory_space<smem>>
    memref.store %c0_i32, %arg17[%c0_7] : memref<40xi32, #tpu.memory_space<smem>>
    %c3_i32 = arith.constant 3 : i32
    %c0_8 = arith.constant 0 : index
    %5 = memref.load %arg18[%c0_8] : memref<40xi32, #tpu.memory_space<smem>>
    memref.store %c3_i32, %arg18[%c0_8] : memref<40xi32, #tpu.memory_space<smem>>
    %c0_i32_9 = arith.constant 0 : i32
    %c16_i32 = arith.constant 16 : i32
    %6 = arith.addi %c0_i32_9, %c16_i32 : i32
    %c1_i32 = arith.constant 1 : i32
    scf.for %arg20 = %c0_i32_9 to %6 step %c1_i32  : i32 {
      %c-1_i32 = arith.constant -1 : i32
      %17 = arith.index_cast %arg20 : i32 to index
      %18 = memref.load %arg10[%17] : memref<16xi32, #tpu.memory_space<smem>>
      memref.store %c-1_i32, %arg10[%17] : memref<16xi32, #tpu.memory_space<smem>>
      %c-1_i32_23 = arith.constant -1 : i32
      %19 = arith.index_cast %arg20 : i32 to index
      %20 = memref.load %arg11[%19] : memref<16xi32, #tpu.memory_space<smem>>
      memref.store %c-1_i32_23, %arg11[%19] : memref<16xi32, #tpu.memory_space<smem>>
      %c-1_i32_24 = arith.constant -1 : i32
      %21 = arith.index_cast %arg20 : i32 to index
      %22 = memref.load %arg12[%21] : memref<16xi32, #tpu.memory_space<smem>>
      memref.store %c-1_i32_24, %arg12[%21] : memref<16xi32, #tpu.memory_space<smem>>
    }
    %c16_i32_10 = arith.constant 16 : i32
    %c0_11 = arith.constant 0 : index
    %c0_12 = arith.constant 0 : index
    %7 = vector.load %arg6[%c0_11, %c0_12] : memref<32x128xbf16, #tpu.memory_space<vmem>>, vector<32x128xbf16>
    %c0_13 = arith.constant 0 : index
    %c0_14 = arith.constant 0 : index
    %8 = vector.load %arg7[%c0_13, %c0_14] : memref<32x8xbf16, #tpu.memory_space<vmem>>, vector<32x8xbf16>
    %c0_15 = arith.constant 0 : index
    %c0_16 = arith.constant 0 : index
    %9 = vector.load %arg8[%c0_15, %c0_16] : memref<1x8xf32, #tpu.memory_space<vmem>>, vector<1x8xf32>
    %c0_17 = arith.constant 0 : index
    %c0_18 = arith.constant 0 : index
    %10 = vector.load %arg9[%c0_17, %c0_18] : memref<1x8xi32, #tpu.memory_space<vmem>>, vector<1x8xi32>
    %11 = tpu.iota {dimensions = array<i32: 1>} : vector<1x8xi32>
    %12 = arith.sitofp %11 : vector<1x8xi32> to vector<1x8xf32>
    %cst = arith.constant 8.000000e+00 : f32
    %13 = vector.broadcast %cst : f32 to vector<1x8xf32>
    %cst_19 = arith.constant -1.000000e+09 : f32
    %14 = vector.broadcast %cst_19 : f32 to vector<1x8xf32>
    %c0_i32_20 = arith.constant 0 : i32
    %c1_i32_21 = arith.constant 1 : i32
    %15:2 = scf.while (%arg20 = %c0_i32_20, %arg21 = %c1_i32_21) : (i32, i32) -> (i32, i32) {
      %c0_i32_23 = arith.constant 0 : i32
      %17 = arith.cmpi sgt, %arg21, %c0_i32_23 : i32
      %c16_i32_24 = arith.constant 16 : i32
      %18 = arith.cmpi slt, %arg20, %c16_i32_24 : i32
      %19 = arith.andi %17, %18 : i1
      scf.condition(%19) %arg20, %arg21 : i32, i32
    } do {
    ^bb0(%arg20: i32, %arg21: i32):
      %c1_i32_23 = arith.constant 1 : i32
      %17 = arith.subi %arg21, %c1_i32_23 : i32
      %18 = arith.index_cast %17 : i32 to index
      %19 = memref.load %arg17[%18] : memref<40xi32, #tpu.memory_space<smem>>
      %20 = arith.index_cast %17 : i32 to index
      %21 = memref.load %arg18[%20] : memref<40xi32, #tpu.memory_space<smem>>
      %22 = arith.index_cast %arg20 : i32 to index
      %23 = memref.load %arg10[%22] : memref<16xi32, #tpu.memory_space<smem>>
      memref.store %19, %arg10[%22] : memref<16xi32, #tpu.memory_space<smem>>
      %24 = arith.index_cast %arg20 : i32 to index
      %25 = memref.load %arg11[%24] : memref<16xi32, #tpu.memory_space<smem>>
      memref.store %21, %arg11[%24] : memref<16xi32, #tpu.memory_space<smem>>
      %c0_24 = arith.constant 0 : index
      %26 = memref.load %arg19[%c0_24] : memref<1xi32, #tpu.memory_space<smem>>
      memref.store %17, %arg19[%c0_24] : memref<1xi32, #tpu.memory_space<smem>>
      %c3_i32_25 = arith.constant 3 : i32
      %27 = arith.cmpi slt, %19, %c3_i32_25 : i32
      %28 = arith.extui %27 : i1 to i32
      %c0_i32_26 = arith.constant 0 : i32
      %29 = arith.cmpi ne, %28, %c0_i32_26 : i32
      scf.if %29 {
        %32 = arith.index_cast %21 : i32 to index
        %c0_29 = arith.constant 0 : index
        %33 = vector.load %arg4[%32, %c0_29] : memref<4x128xf32, #tpu.memory_space<vmem>>, vector<1x128xf32>
        %34 = arith.index_cast %19 : i32 to index
        %c0_30 = arith.constant 0 : index
        %35 = vector.load %arg5[%34, %c0_30] : memref<4x128xf32, #tpu.memory_space<vmem>>, vector<1x128xf32>
        %c0_31 = arith.constant 0 : index
        %c0_32 = arith.constant 0 : index
        %36 = vector.load %arg14[%c0_31, %c0_32] : memref<1x32xf32, #tpu.memory_space<vmem>>, vector<1x32xf32>
        %37 = arith.truncf %36 : vector<1x32xf32> to vector<1x32xbf16>
        %cst_33 = arith.constant dense<0.000000e+00> : vector<1x128xf32>
        %38 = tpu.matmul %37, %7, %cst_33 {dimension_numbers = #tpu.dot_dimension_numbers<[1], [0], [0], [1], [0, 0, 1, 1], [], []>} : vector<1x32xbf16>, vector<32x128xbf16>, vector<1x128xf32> -> vector<1x128xf32>
        %39 = arith.addf %33, %35 : vector<1x128xf32>
        %40 = arith.addf %39, %38 : vector<1x128xf32>
        %41 = vector.extract_strided_slice %40 {offsets = [0, 0], sizes = [1, 32], strides = [1, 1]} : vector<1x128xf32> to vector<1x32xf32>
        %42 = arith.negf %41 : vector<1x32xf32>
        %43 = math.exp %42 : vector<1x32xf32>
        %cst_34 = arith.constant 1.000000e+00 : f32
        %44 = vector.broadcast %cst_34 : f32 to vector<1x32xf32>
        %45 = arith.addf %44, %43 : vector<1x32xf32>
        %46 = arith.divf %44, %45 : vector<1x32xf32>
        %47 = vector.extract_strided_slice %40 {offsets = [0, 32], sizes = [1, 32], strides = [1, 1]} : vector<1x128xf32> to vector<1x32xf32>
        %48 = arith.negf %47 : vector<1x32xf32>
        %49 = math.exp %48 : vector<1x32xf32>
        %cst_35 = arith.constant 1.000000e+00 : f32
        %50 = vector.broadcast %cst_35 : f32 to vector<1x32xf32>
        %51 = arith.addf %50, %49 : vector<1x32xf32>
        %52 = arith.divf %50, %51 : vector<1x32xf32>
        %53 = vector.extract_strided_slice %40 {offsets = [0, 64], sizes = [1, 32], strides = [1, 1]} : vector<1x128xf32> to vector<1x32xf32>
        %54 = math.tanh %53 : vector<1x32xf32>
        %55 = vector.extract_strided_slice %40 {offsets = [0, 96], sizes = [1, 32], strides = [1, 1]} : vector<1x128xf32> to vector<1x32xf32>
        %56 = arith.negf %55 : vector<1x32xf32>
        %57 = math.exp %56 : vector<1x32xf32>
        %cst_36 = arith.constant 1.000000e+00 : f32
        %58 = vector.broadcast %cst_36 : f32 to vector<1x32xf32>
        %59 = arith.addf %58, %57 : vector<1x32xf32>
        %60 = arith.divf %58, %59 : vector<1x32xf32>
        %c0_37 = arith.constant 0 : index
        %c0_38 = arith.constant 0 : index
        %61 = vector.load %arg15[%c0_37, %c0_38] : memref<1x32xf32, #tpu.memory_space<vmem>>, vector<1x32xf32>
        %62 = arith.mulf %52, %61 : vector<1x32xf32>
        %63 = arith.mulf %46, %54 : vector<1x32xf32>
        %64 = arith.addf %62, %63 : vector<1x32xf32>
        %65 = math.tanh %64 : vector<1x32xf32>
        %66 = arith.mulf %60, %65 : vector<1x32xf32>
        %c0_39 = arith.constant 0 : index
        %c0_40 = arith.constant 0 : index
        %67 = vector.load %arg14[%c0_39, %c0_40] : memref<1x32xf32, #tpu.memory_space<vmem>>, vector<1x32xf32>
        tpu.vector_store %arg14[%c0_39, %c0_40], %66 {strides = array<i32>} : memref<1x32xf32, #tpu.memory_space<vmem>>, vector<1x32xf32>,
        %c0_41 = arith.constant 0 : index
        %c0_42 = arith.constant 0 : index
        %68 = vector.load %arg15[%c0_41, %c0_42] : memref<1x32xf32, #tpu.memory_space<vmem>>, vector<1x32xf32>
        tpu.vector_store %arg15[%c0_41, %c0_42], %64 {strides = array<i32>} : memref<1x32xf32, #tpu.memory_space<vmem>>, vector<1x32xf32>,
        %69 = arith.truncf %66 : vector<1x32xf32> to vector<1x32xbf16>
        %cst_43 = arith.constant dense<0.000000e+00> : vector<1x8xf32>
        %70 = tpu.matmul %69, %8, %cst_43 {dimension_numbers = #tpu.dot_dimension_numbers<[1], [0], [0], [1], [0, 0, 1, 1], [], []>} : vector<1x32xbf16>, vector<32x8xbf16>, vector<1x8xf32> -> vector<1x8xf32>
        %71 = arith.addf %70, %9 : vector<1x8xf32>
        %72 = vector.broadcast %19 : i32 to vector<1x8xi32>
        %73 = arith.cmpi eq, %10, %72 : vector<1x8xi32>
        %74 = arith.select %73, %71, %14 : vector<1x8xi1>, vector<1x8xf32>
        %cst_44 = arith.constant dense<0xFF800000> : vector<1xf32>
        %75 = vector.multi_reduction <maximumf>, %74, %cst_44 [1] : vector<1x8xf32> to vector<1xf32>
        %76 = vector.shape_cast %75 : vector<1xf32> to vector<1x1xf32>
        %77 = vector.broadcast %76 : vector<1x1xf32> to vector<1x8xf32>
        %78 = arith.cmpf oge, %74, %77 : vector<1x8xf32>
        %79 = arith.select %78, %12, %13 : vector<1x8xi1>, vector<1x8xf32>
        %cst_45 = arith.constant dense<0x7F800000> : vector<1xf32>
        %80 = vector.multi_reduction <minimumf>, %79, %cst_45 [1] : vector<1x8xf32> to vector<1xf32>
        %81 = vector.shape_cast %80 : vector<1xf32> to vector<1x1xf32>
        %82 = arith.fptosi %81 : vector<1x1xf32> to vector<1x1xi32>
        %c0_46 = arith.constant 0 : index
        %c0_47 = arith.constant 0 : index
        %83 = vector.load %arg16[%c0_46, %c0_47] : memref<1x1xi32, #tpu.memory_space<vmem>>, vector<1x1xi32>
        tpu.vector_store %arg16[%c0_46, %c0_47], %82 {strides = array<i32>} : memref<1x1xi32, #tpu.memory_space<vmem>>, vector<1x1xi32>,
        %c0_48 = arith.constant 0 : index
        %c0_49 = arith.constant 0 : index
        %84 = vector.load %arg16[%c0_48, %c0_49] : memref<1x1xi32, #tpu.memory_space<vmem>>, vector<1x1xi32>
        %85 = vector.extract %84[0, 0] : i32 from vector<1x1xi32>
        %86 = arith.index_cast %arg20 : i32 to index
        %87 = memref.load %arg12[%86] : memref<16xi32, #tpu.memory_space<smem>>
        memref.store %85, %arg12[%86] : memref<16xi32, #tpu.memory_space<smem>>
        %88 = arith.index_cast %85 : i32 to index
        %89 = memref.load %arg1[%88] : memref<8xi32, #tpu.memory_space<smem>>
        %c0_i32_50 = arith.constant 0 : i32
        %90 = arith.cmpi sgt, %89, %c0_i32_50 : i32
        %91 = arith.extui %90 : i1 to i32
        %c0_i32_51 = arith.constant 0 : i32
        %92 = arith.cmpi ne, %91, %c0_i32_51 : i32
        scf.if %92 {
          %c2_i32 = arith.constant 2 : i32
          %98 = arith.muli %85, %c2_i32 : i32
          %c1_i32_55 = arith.constant 1 : i32
          %99 = arith.subi %89, %c1_i32_55 : i32
          %c0_i32_56 = arith.constant 0 : i32
          %100 = arith.subi %99, %c0_i32_56 : i32
          %101 = arith.addi %98, %100 : i32
          %102 = arith.index_cast %101 : i32 to index
          %103 = memref.load %arg2[%102] : memref<16xi32, #tpu.memory_space<smem>>
          %c0_i32_57 = arith.constant 0 : i32
          %104 = arith.addi %17, %c0_i32_57 : i32
          %105 = arith.index_cast %104 : i32 to index
          %106 = memref.load %arg17[%105] : memref<40xi32, #tpu.memory_space<smem>>
          memref.store %103, %arg17[%105] : memref<40xi32, #tpu.memory_space<smem>>
          %c0_i32_58 = arith.constant 0 : i32
          %107 = arith.addi %17, %c0_i32_58 : i32
          %108 = arith.index_cast %107 : i32 to index
          %109 = memref.load %arg18[%108] : memref<40xi32, #tpu.memory_space<smem>>
          memref.store %19, %arg18[%108] : memref<40xi32, #tpu.memory_space<smem>>
        } else {
        }
        %c1_i32_52 = arith.constant 1 : i32
        %93 = arith.cmpi sgt, %89, %c1_i32_52 : i32
        %94 = arith.extui %93 : i1 to i32
        %c0_i32_53 = arith.constant 0 : i32
        %95 = arith.cmpi ne, %94, %c0_i32_53 : i32
        scf.if %95 {
          %c2_i32 = arith.constant 2 : i32
          %98 = arith.muli %85, %c2_i32 : i32
          %c1_i32_55 = arith.constant 1 : i32
          %99 = arith.subi %89, %c1_i32_55 : i32
          %c1_i32_56 = arith.constant 1 : i32
          %100 = arith.subi %99, %c1_i32_56 : i32
          %101 = arith.addi %98, %100 : i32
          %102 = arith.index_cast %101 : i32 to index
          %103 = memref.load %arg2[%102] : memref<16xi32, #tpu.memory_space<smem>>
          %c1_i32_57 = arith.constant 1 : i32
          %104 = arith.addi %17, %c1_i32_57 : i32
          %105 = arith.index_cast %104 : i32 to index
          %106 = memref.load %arg17[%105] : memref<40xi32, #tpu.memory_space<smem>>
          memref.store %103, %arg17[%105] : memref<40xi32, #tpu.memory_space<smem>>
          %c1_i32_58 = arith.constant 1 : i32
          %107 = arith.addi %17, %c1_i32_58 : i32
          %108 = arith.index_cast %107 : i32 to index
          %109 = memref.load %arg18[%108] : memref<40xi32, #tpu.memory_space<smem>>
          memref.store %19, %arg18[%108] : memref<40xi32, #tpu.memory_space<smem>>
        } else {
        }
        %96 = arith.addi %17, %89 : i32
        %c0_54 = arith.constant 0 : index
        %97 = memref.load %arg19[%c0_54] : memref<1xi32, #tpu.memory_space<smem>>
        memref.store %96, %arg19[%c0_54] : memref<1xi32, #tpu.memory_space<smem>>
      } else {
      }
      %c1_i32_27 = arith.constant 1 : i32
      %30 = arith.addi %arg20, %c1_i32_27 : i32
      %c0_28 = arith.constant 0 : index
      %31 = memref.load %arg19[%c0_28] : memref<1xi32, #tpu.memory_space<smem>>
      scf.yield %30, %31 : i32, i32
    }
    %c0_22 = arith.constant 0 : index
    %16 = memref.load %arg13[%c0_22] : memref<1xi32, #tpu.memory_space<smem>>
    memref.store %15#0, %arg13[%c0_22] : memref<1xi32, #tpu.memory_space<smem>>
    return
  }
  func.func @transform_0(%arg0: i32, %arg1: memref<8xi32, #tpu.memory_space<smem>>, %arg2: memref<16xi32, #tpu.memory_space<smem>>) -> (i32, i32) {
    %c0_i32 = arith.constant 0 : i32
    %c0_i32_0 = arith.constant 0 : i32
    %c0_i32_1 = arith.constant 0 : i32
    return %c0_i32, %c0_i32_0 : i32, i32
  }
  func.func @transform_1(%arg0: i32, %arg1: memref<8xi32, #tpu.memory_space<smem>>, %arg2: memref<16xi32, #tpu.memory_space<smem>>) -> (i32, i32) {
    %c0_i32 = arith.constant 0 : i32
    %c0_i32_0 = arith.constant 0 : i32
    %c0_i32_1 = arith.constant 0 : i32
    return %c0_i32, %c0_i32_0 : i32, i32
  }
  func.func @transform_2(%arg0: i32, %arg1: memref<8xi32, #tpu.memory_space<smem>>, %arg2: memref<16xi32, #tpu.memory_space<smem>>) -> (i32, i32) {
    %c0_i32 = arith.constant 0 : i32
    %c0_i32_0 = arith.constant 0 : i32
    %c0_i32_1 = arith.constant 0 : i32
    return %c0_i32, %c0_i32_0 : i32, i32
  }
  func.func @transform_3(%arg0: i32, %arg1: memref<8xi32, #tpu.memory_space<smem>>, %arg2: memref<16xi32, #tpu.memory_space<smem>>) -> (i32, i32) {
    %c0_i32 = arith.constant 0 : i32
    %c0_i32_0 = arith.constant 0 : i32
    %c0_i32_1 = arith.constant 0 : i32
    return %c0_i32, %c0_i32_0 : i32, i32
  }
  func.func @transform_4(%arg0: i32, %arg1: memref<8xi32, #tpu.memory_space<smem>>, %arg2: memref<16xi32, #tpu.memory_space<smem>>) -> (i32, i32) {
    %c0_i32 = arith.constant 0 : i32
    %c0_i32_0 = arith.constant 0 : i32
    %c0_i32_1 = arith.constant 0 : i32
    return %c0_i32, %c0_i32_0 : i32, i32
  }
  func.func @transform_5(%arg0: i32, %arg1: memref<8xi32, #tpu.memory_space<smem>>, %arg2: memref<16xi32, #tpu.memory_space<smem>>) -> (i32, i32) {
    %c0_i32 = arith.constant 0 : i32
    %c0_i32_0 = arith.constant 0 : i32
    %c0_i32_1 = arith.constant 0 : i32
    return %c0_i32, %c0_i32_0 : i32, i32
  }
  func.func @transform_6(%arg0: i32, %arg1: memref<8xi32, #tpu.memory_space<smem>>, %arg2: memref<16xi32, #tpu.memory_space<smem>>) -> (i32, i32) {
    %c0_i32 = arith.constant 0 : i32
    %c0_i32_0 = arith.constant 0 : i32
    %c0_i32_1 = arith.constant 0 : i32
    return %c0_i32, %c0_i32_0 : i32, i32
  }
  func.func @transform_7(%arg0: i32, %arg1: memref<8xi32, #tpu.memory_space<smem>>, %arg2: memref<16xi32, #tpu.memory_space<smem>>) -> i32 {
    %c0_i32 = arith.constant 0 : i32
    %c0_i32_0 = arith.constant 0 : i32
    return %c0_i32 : i32
  }
  func.func @transform_8(%arg0: i32, %arg1: memref<8xi32, #tpu.memory_space<smem>>, %arg2: memref<16xi32, #tpu.memory_space<smem>>) -> i32 {
    %c0_i32 = arith.constant 0 : i32
    %c0_i32_0 = arith.constant 0 : i32
    return %c0_i32 : i32
  }
  func.func @transform_9(%arg0: i32, %arg1: memref<8xi32, #tpu.memory_space<smem>>, %arg2: memref<16xi32, #tpu.memory_space<smem>>) -> i32 {
    %c0_i32 = arith.constant 0 : i32
    %c0_i32_0 = arith.constant 0 : i32
    return %c0_i32 : i32
  }
  func.func @transform_10(%arg0: i32, %arg1: memref<8xi32, #tpu.memory_space<smem>>, %arg2: memref<16xi32, #tpu.memory_space<smem>>) -> i32 {
    %c0_i32 = arith.constant 0 : i32
    %c0_i32_0 = arith.constant 0 : i32
    return %c0_i32 : i32
  }
}

</mosaic_0001>

<llo_original>
// kernel: tpu_custom_call.1
$region0: #{tpu_custom_call.1}
  #allocation0 [shape = 'u32[]', space=smem, size = 0x4, offset = 0x4, fixed_abs, tag = 'smem constant byte address 0x4 - core index']
  #allocation1 [shape = 'u32[144,128]{1,0:T(1,128)}', space=vmem, size = 0x12000, scoped, tag = 'internal scratch']
  #allocation2 [shape = 'f32[1,32]{1,0:T(1,128)}', space=vmem, size = 0x200, scoped, tag = 'scratch operand']
  #allocation3 [shape = 'f32[1,32]{1,0:T(1,128)}', space=vmem, size = 0x200, scoped, tag = 'scratch operand']
  #allocation4 [shape = 's32[1,1]{1,0:T(1,128)}', space=vmem, size = 0x200, scoped, tag = 'scratch operand']
  #allocation5 [shape = 's32[40]{0:T(128)}', space=smem, size = 0x200, scoped, tag = 'scratch operand']
  #allocation6 [shape = 's32[40]{0:T(128)}', space=smem, size = 0x200, scoped, tag = 'scratch operand']
  #allocation7 [shape = 's32[1]{0:T(128)}', space=smem, size = 0x200, scoped, tag = 'scratch operand']
  #allocation8 [shape = 's32[1]{0}', space=sflag, size = 0x4, scoped, tag = 'scoped memory for tpu_custom_call.1']
  #allocation9 [shape = 'u8[512]{0}', space=smem, size = 0x200, scoped, tag = 'prefetched SMEM operand 0']
  #allocation10 [shape = 'u8[512]{0}', space=smem, size = 0x200, scoped, tag = 'prefetched SMEM operand 1']
  %s0 = inlined_call_operand.vmem [shape: s32[8], index: 0, kind: input, shape index: {}]
  %s1 = inlined_call_operand.vmem [shape: s32[16], index: 1, kind: input, shape index: {}]
  %s2 = inlined_call_operand.vmem [shape: f32[1,32], index: 2, kind: input, shape index: {}]
  %s3 = inlined_call_operand.vmem [shape: f32[4,128], index: 3, kind: input, shape index: {}]
  %s4 = inlined_call_operand.vmem [shape: f32[4,128], index: 4, kind: input, shape index: {}]
  %s5 = inlined_call_operand.vmem [shape: bf16[32,128], index: 5, kind: input, shape index: {}]
  %s6 = inlined_call_operand.vmem [shape: bf16[32,8], index: 6, kind: input, shape index: {}]
  %s7 = inlined_call_operand.vmem [shape: f32[1,8], index: 7, kind: input, shape index: {}]
  %s8 = inlined_call_operand.vmem [shape: s32[1,8], index: 8, kind: input, shape index: {}]
  %s9 = inlined_call_operand.hbm [shape: s32[16], index: 9, kind: output, shape index: {0}]
  %s10 = inlined_call_operand.hbm [shape: s32[16], index: 10, kind: output, shape index: {1}]
  %s11 = inlined_call_operand.hbm [shape: s32[16], index: 11, kind: output, shape index: {2}]
  %s12 = inlined_call_operand.hbm [shape: s32[1], index: 12, kind: output, shape index: {3}]
  %13 = xla_tuple %s9, %s10, %s11, %s12
  %s14 = sld [smem:[#allocation0]]
  $region88: #{tpu_custom_call.1} parent=0
    _
  %s16 = ssub.s32 1, %s14
  %s17 = scalar_select 0, %s16, %s14
  %s18 = sshll.u32 %s0, 4
  %s19 = int_to_ptr.vmem [resolvable:$true] %s18
  %21 = dma.vmem_to_smem %s19, 16, [#allocation9], [#allocation8]
  %s22 = sshll.u32 %s1, 4
  %s23 = int_to_ptr.vmem [resolvable:$true] %s22
  %25 = dma.vmem_to_smem %s23, 16, [#allocation10], [#allocation8]
  %26 = dma.done [#allocation8], 32
  %27 = sfence
  $region1: #{tpu_custom_call.1} parent=0
    #allocation11 [shape = 'u8[512]{0}', space=smem, size = 0x200, scoped, tag = 'output window, operand 0, single buffered']
    #allocation12 [shape = 's32[1]{0}', space=sflag, size = 0x4, scoped, tag = 'scoped memory for tpu_custom_call.1']
    #allocation13 [shape = 'u8[512]{0}', space=smem, size = 0x200, scoped, tag = 'output window, operand 1, single buffered']
    #allocation14 [shape = 's32[1]{0}', space=sflag, size = 0x4, scoped, tag = 'scoped memory for tpu_custom_call.1']
    #allocation15 [shape = 'u8[512]{0}', space=smem, size = 0x200, scoped, tag = 'output window, operand 2, single buffered']
    #allocation16 [shape = 'u8[512]{0}', space=smem, size = 0x200, scoped, tag = 'output window, operand 3, single buffered']
    #allocation17 [shape = 's32[1]{0}', space=sflag, size = 0x4, scoped, tag = 'scoped memory for tpu_custom_call.1']
    %28 = vsyncpa [#allocation12], 0
    %29 = vsyncpa [#allocation14], 0
    %30 = vsyncpa [#allocation17], 0
    // Predicated region
    $region2: #{tpu_custom_call.1} parent=1 // pred_check
      _
    $region3: #{tpu_custom_call.1} parent=1 // pred_check_branch
      %32 = sbr.rel (0) target = $region5
    $region4: #{tpu_custom_call.1} parent=1 // pred_region
      _
    $region5: #{tpu_custom_call.1} parent=1 // pred_fallthru
      _
    // Predicated region
    $region6: #{tpu_custom_call.1} parent=1 // pred_check
      _
    $region7: #{tpu_custom_call.1} parent=1 // pred_check_branch
      %34 = sbr.rel (0) target = $region9
    $region8: #{tpu_custom_call.1} parent=1 // pred_region
      _
    $region9: #{tpu_custom_call.1} parent=1 // pred_fallthru
      _
    // Predicated region
    $region10: #{tpu_custom_call.1} parent=1 // pred_check
      _
    $region11: #{tpu_custom_call.1} parent=1 // pred_check_branch
      %36 = sbr.rel (0) target = $region13
    $region12: #{tpu_custom_call.1} parent=1 // pred_region
      _
    $region13: #{tpu_custom_call.1} parent=1 // pred_fallthru
      _
    // Predicated region
    $region14: #{tpu_custom_call.1} parent=1 // pred_check
      _
    $region15: #{tpu_custom_call.1} parent=1 // pred_check_branch
      %38 = sbr.rel (0) target = $region17
    $region16: #{tpu_custom_call.1} parent=1 // pred_region
      _
    $region17: #{tpu_custom_call.1} parent=1 // pred_fallthru
      _
    // Predicated region
    $region18: #{tpu_custom_call.1} parent=1 // pred_check
      _
    $region19: #{tpu_custom_call.1} parent=1 // pred_check_branch
      %40 = sbr.rel (0) target = $region21
    $region20: #{tpu_custom_call.1} parent=1 // pred_region
      _
    $region21: #{tpu_custom_call.1} parent=1 // pred_fallthru
      _
    // Predicated region
    $region22: #{tpu_custom_call.1} parent=1 // pred_check
      _
    $region23: #{tpu_custom_call.1} parent=1 // pred_check_branch
      %42 = sbr.rel (0) target = $region25
    $region24: #{tpu_custom_call.1} parent=1 // pred_region
      _
    $region25: #{tpu_custom_call.1} parent=1 // pred_fallthru
      _
    // Predicated region
    $region26: #{tpu_custom_call.1} parent=1 // pred_check
      _
    $region27: #{tpu_custom_call.1} parent=1 // pred_check_branch
      %44 = sbr.rel (0) target = $region29
    $region28: #{tpu_custom_call.1} parent=1 // pred_region
      _
    $region29: #{tpu_custom_call.1} parent=1 // pred_fallthru
      _
    %v46 = vld [vmem:[%s2] sm:$0x1]
    %vm47 = vcmask 253952
    %48 = vst.msk [vmem:[#allocation2] sm:$0x1] %vm47, %v46
    %v49 = vld [vmem:[%s2] sm:$0x1]
    %50 = vst.msk [vmem:[#allocation3] sm:$0x1] %vm47, %v49
    %s51 = scalar_lea.smem [#allocation5], 0
    %52 = sst [smem:[%s51]] 0
    %s53 = scalar_lea.smem [#allocation6], 0
    %54 = sst [smem:[%s53]] 3
    loop: start=0, step=1, limit=16
    $region30: #{tpu_custom_call.1} parent=1 // loop_pre_header
      _
    $region31: #{tpu_custom_call.1} parent=1 // loop_header
      %s56 = sphi 0, %s60
      %p57 = scmp.ge.s32.totalorder %s56, 16
    $region32: #{tpu_custom_call.1} parent=1 // loop_header_branch
      %59 = sbr.rel (%p57) target = $region36
    $region33: #{tpu_custom_call.1} parent=1 // loop_body
      %s61 = scalar_lea.smem [#allocation11], %s56
      %62 = sst [smem:[%s61]] 4294967295
      %s63 = scalar_lea.smem [#allocation13], %s56
      %64 = sst [smem:[%s63]] 4294967295
      %s65 = scalar_lea.smem [#allocation15], %s56
      %66 = sst [smem:[%s65]] 4294967295
    $region34: #{tpu_custom_call.1} parent=1 // loop_footer
      %s60 = sadd.s32 1, %s56
    $region35: #{tpu_custom_call.1} parent=1 // loop_footer_branch
      %55 = sbr.rel target = $region31
    $region36: #{tpu_custom_call.1} parent=1 // loop_exit
      _
    %v67 = vld [vmem:[%s5] sm:$0xf]
    %v68 = vld [vmem:[%s5 + $0x4] sm:$0xf]
    %v69 = vld [vmem:[%s5 + $0x8] sm:$0xf]
    %v70 = vld [vmem:[%s5 + $0xc] sm:$0xf]
    %v71 = vld [vmem:[%s6] sm:$0xf]
    %v72 = vld [vmem:[%s6 + $0x4] sm:$0xf]
    %v73 = vld [vmem:[%s6 + $0x8] sm:$0xf]
    %v74 = vld [vmem:[%s6 + $0xc] sm:$0xf]
    %v75 = vld [vmem:[%s7] sm:$0x1]
    %v76 = vld [vmem:[%s8] sm:$0x1]
    %v77 = vlaneseq
    %v78 = vand.u32 %v77, 127
    %v79 = vcvt.s32.f32 %v78
    // While loop
    $region37: #{tpu_custom_call.1} parent=1 // loop_pre_header
      _
    $region38: #{tpu_custom_call.1} parent=1 // loop_header
      %s81 = sphi 0, %s314
      %s82 = sphi 1, %s315
      %p83 = scmp.gt.s32.totalorder %s82, 0
      %p84 = scmp.lt.s32.totalorder %s81, 16
      %p85 = pnand %p83, %p84
      %p86 = pneg %p85
    $region39: #{tpu_custom_call.1} parent=1 // loop_header_branch
      %88 = sbr.rel (%p85) target = $region43
    $region40: #{tpu_custom_call.1} parent=1 // loop_body
      %s89 = ssub.s32 %s82, 1
      %s90 = sld [smem:[#allocation5 + %s89]]
      %s91 = sld [smem:[#allocation6 + %s89]]
      %s92 = scalar_lea.smem [#allocation11], %s81
      %93 = sst [smem:[%s92]] %s90
      %s94 = scalar_lea.smem [#allocation13], %s81
      %95 = sst [smem:[%s94]] %s91
      %s96 = scalar_lea.smem [#allocation7], 0
      %97 = sst [smem:[%s96]] %s89
      %p98 = scmp.lt.s32.totalorder %s90, 3
      // Predicated region
      $region44: #{tpu_custom_call.1} parent=40 // pred_check
        %p99 = pneg %p98
      $region45: #{tpu_custom_call.1} parent=40 // pred_check_branch
        %101 = sbr.rel (%p99) target = $region47
      $region46: #{tpu_custom_call.1} parent=40 // pred_region
        %s102 = scalar_lea.vmem %s3, %s91
        %v103 = vld [vmem:[%s102] sm:$0x1]
        %s104 = scalar_lea.vmem %s4, %s90
        %v105 = vld [vmem:[%s104] sm:$0x1]
        %v106 = vld [vmem:[#allocation2] sm:$0x1]
        %v107 = vpack.c.bf16 %v106, %v106
        %v112 = vunpack.c.l.b16 %v67
        %v113 = vunpack.c.l.b16 %v68
        %v114 = vunpack.c.l.b16 %v69
        %v115 = vunpack.c.l.b16 %v70
        %v116 = vpack.c.b16 %v113, %v112
        %v117 = vpack.c.b16 %v115, %v114
        %vm120 = vcmask 261120
        %v122 = vsel %vm120, %v107, 0
        %124 = vmatprep.subr.bf16.mxu0 0
        %125 = vmatpush1.bf16.msra.mxu0 %v116
        %126 = vmatprep.subr.bf16.mxu0 0
        %127 = vmatpush1.bf16.msra.mxu0 %v117
        %128 = vmatprep.subr.bf16.mxu0 0
        %129 = vmatpush1.bf16.msra.mxu0 0
        %130 = vmatprep.subr.bf16.mxu0 0
        %131 = vmatpush1.bf16.msra.mxu0 0
        %132 = vmatprep.subr.bf16.mxu0 0
        %133 = vmatpush1.bf16.msra.mxu0 0
        %134 = vmatprep.subr.bf16.mxu0 0
        %135 = vmatpush1.bf16.msra.mxu0 0
        %136 = vmatprep.subr.bf16.mxu0 0
        %137 = vmatpush1.bf16.msra.mxu0 0
        %138 = vmatprep.subr.bf16.mxu0 0
        %139 = vmatpush1.bf16.msra.mxu0 0
        %140 = vmatprep.subr.bf16.mxu0 0
        %141 = vmatpush1.bf16.msra.mxu0 0
        %142 = vmatprep.subr.bf16.mxu0 0
        %143 = vmatpush1.bf16.msra.mxu0 0
        %144 = vmatprep.subr.bf16.mxu0 0
        %145 = vmatpush1.bf16.msra.mxu0 0
        %146 = vmatprep.subr.bf16.mxu0 0
        %147 = vmatpush1.bf16.msra.mxu0 0
        %148 = vmatprep.subr.bf16.mxu0 0
        %149 = vmatpush1.bf16.msra.mxu0 0
        %150 = vmatprep.subr.bf16.mxu0 0
        %151 = vmatpush1.bf16.msra.mxu0 0
        %152 = vmatprep.subr.bf16.mxu0 0
        %153 = vmatpush1.bf16.msra.mxu0 0
        %154 = vmatprep.subr.bf16.mxu0 0
        %155 = vmatpush1.bf16.msra.mxu0 0
        %156 = vmatprep.mubr.bf16.mxu0 0
        %157 = vmatmul.mubr.bf16.gmra.mrb[0].mxu0 %v122
        %v158 = vpop.f32.mrb[0].mxu0
        %v159 = vadd.f32 0.0, %v158
        %v160 = vpop.f32.mrb[0].mxu0
        %v161 = vpop.f32.mrb[0].mxu0
        %v162 = vpop.f32.mrb[0].mxu0
        %163 = vdwg.mxu0
        %v164 = vadd.f32 %v103, %v105
        %v165 = vadd.f32 %v164, %v159
        %v166 = vxor.u32 %v165, 2147483648
        %v167 = vmul.f32 %v166, 1.442695
        %v168 = vpow.pop %v167
        %v169 = vadd.f32 %v168, 1.0
        %v170 = vrcp.pop %v169
        %v171 = vmul.f32 1.0, %v170
        %v172 = vtanh.pop %v165
        %v173 = vld [vmem:[#allocation3] sm:$0x1]
        %v175 = vlaneseq
        %v176 = vshrl.u32 %v175, 7
        %v177 = vsub.s32 0, %v176
        %v178 = vrot.slane %v173, %v177
        %179 = vrot.lane.b32.xlu0 %v178, 32
        %v180 = vpop.permute.xlu0 %179
        %v182 = vmul.f32 %v171, %v180
        %184 = vrot.lane.b32.xlu0 %v172, 64
        %v185 = vpop.permute.xlu0 %184
        %v187 = vmul.f32 %v171, %v185
        %189 = vrot.lane.b32.xlu0 %v187, 32
        %v190 = vpop.permute.xlu0 %189
        %v192 = vadd.f32 %v182, %v190
        %v193 = vtanh.pop %v192
        %195 = vrot.lane.b32.xlu0 %v193, 64
        %v196 = vpop.permute.xlu0 %195
        %v198 = vmul.f32 %v171, %v196
        %200 = vrot.lane.b32.xlu0 %v198, 32
        %v201 = vpop.permute.xlu0 %200
        %203 = vst.msk [vmem:[#allocation2] sm:$0x1] %vm47, %v201
        %205 = vrot.lane.b32.xlu0 %v192, 96
        %v206 = vpop.permute.xlu0 %205
        %208 = vst.msk [vmem:[#allocation3] sm:$0x1] %vm47, %v206
        %v209 = vpack.c.bf16 %v198, %v198
        %211 = vrot.lane.b32.xlu0 %v209, 32
        %v212 = vpop.permute.xlu0 %211
        %v217 = vunpack.c.l.b16 %v71
        %v218 = vunpack.c.l.b16 %v72
        %v219 = vunpack.c.l.b16 %v73
        %v220 = vunpack.c.l.b16 %v74
        %v221 = vpack.c.b16 %v218, %v217
        %v222 = vpack.c.b16 %v220, %v219
        %v226 = vsel %vm120, %v212, 0
        %228 = vmatprep.subr.bf16.mxu0 0
        %229 = vmatpush1.bf16.msra.mxu0 %v221
        %230 = vmatprep.subr.bf16.mxu0 0
        %231 = vmatpush1.bf16.msra.mxu0 %v222
        %232 = vmatprep.subr.bf16.mxu0 0
        %233 = vmatpush1.bf16.msra.mxu0 0
        %234 = vmatprep.subr.bf16.mxu0 0
        %235 = vmatpush1.bf16.msra.mxu0 0
        %236 = vmatprep.subr.bf16.mxu0 0
        %237 = vmatpush1.bf16.msra.mxu0 0
        %238 = vmatprep.subr.bf16.mxu0 0
        %239 = vmatpush1.bf16.msra.mxu0 0
        %240 = vmatprep.subr.bf16.mxu0 0
        %241 = vmatpush1.bf16.msra.mxu0 0
        %242 = vmatprep.subr.bf16.mxu0 0
        %243 = vmatpush1.bf16.msra.mxu0 0
        %244 = vmatprep.subr.bf16.mxu0 0
        %245 = vmatpush1.bf16.msra.mxu0 0
        %246 = vmatprep.subr.bf16.mxu0 0
        %247 = vmatpush1.bf16.msra.mxu0 0
        %248 = vmatprep.subr.bf16.mxu0 0
        %249 = vmatpush1.bf16.msra.mxu0 0
        %250 = vmatprep.subr.bf16.mxu0 0
        %251 = vmatpush1.bf16.msra.mxu0 0
        %252 = vmatprep.subr.bf16.mxu0 0
        %253 = vmatpush1.bf16.msra.mxu0 0
        %254 = vmatprep.subr.bf16.mxu0 0
        %255 = vmatpush1.bf16.msra.mxu0 0
        %256 = vmatprep.subr.bf16.mxu0 0
        %257 = vmatpush1.bf16.msra.mxu0 0
        %258 = vmatprep.subr.bf16.mxu0 0
        %259 = vmatpush1.bf16.msra.mxu0 0
        %260 = vmatprep.mubr.bf16.mxu0 0
        %261 = vmatmul.mubr.bf16.gmra.mrb[0].mxu0 %v226
        %v262 = vpop.f32.mrb[0].mxu0
        %v263 = vadd.f32 %v75, %v262
        %v264 = vpop.f32.mrb[0].mxu0
        %v265 = vpop.f32.mrb[0].mxu0
        %v266 = vpop.f32.mrb[0].mxu0
        %267 = vdwg.mxu0
        %v268 = vstv %s90
        %vm269 = vcmp.eq.s32.totalorder %v76, %v268
        %v270 = vsel %vm269, %v263, -1e+09
        %vm271 = vcmask 57344
        %v272 = vsel %vm271, %v270, -inf
        %273 = vmax.xlane.f32.xlu0 %v272
        %v274 = vpop.xlane.xlu0 %273
        %vm275 = vcmp.ge.f32.partialorder %v270, %v274
        %v276 = vsel %vm275, %v79, 8.0
        %v277 = vsel %vm271, %v276, inf
        %278 = vmin.xlane.f32.xlu0 %v277
        %v279 = vpop.xlane.xlu0 %278
        %v280 = vcvt.f32.s32.to.zero.pseudo %v279
        %vm281 = vcmask 0
        %282 = vst.msk [vmem:[#allocation4] sm:$0x1] %vm281, %v280
        %v283 = vld [vmem:[#allocation4] sm:$0x1]
        %s284 = vtos %v283
        %s285 = scalar_lea.smem [#allocation15], %s81
        %286 = sst [smem:[%s285]] %s284
        %s287 = sld [smem:[#allocation9 + %s284]]
        %p288 = scmp.gt.s32.totalorder %s287, 0
        // Predicated region
        $region48: #{tpu_custom_call.1} parent=46 // pred_check
          %p289 = pneg %p288
        $region49: #{tpu_custom_call.1} parent=46 // pred_check_branch
          %291 = sbr.rel (%p289) target = $region51
        $region50: #{tpu_custom_call.1} parent=46 // pred_region
          %s292 = smul.u32 %s284, 2
          %s293 = ssub.s32 %s287, 1
          %s294 = sadd.s32 %s292, %s293
          %s295 = sld [smem:[#allocation10 + %s294]]
          %s296 = scalar_lea.smem [#allocation5], %s89
          %297 = sst [smem:[%s296]] %s295
          %s298 = scalar_lea.smem [#allocation6], %s89
          %299 = sst [smem:[%s298]] %s90
        $region51: #{tpu_custom_call.1} parent=46 // pred_fallthru
          _
        %p300 = scmp.gt.s32.totalorder %s287, 1
        // Predicated region
        $region52: #{tpu_custom_call.1} parent=46 // pred_check
          %p301 = pneg %p300
        $region53: #{tpu_custom_call.1} parent=46 // pred_check_branch
          %303 = sbr.rel (%p301) target = $region55
        $region54: #{tpu_custom_call.1} parent=46 // pred_region
          %s304 = smul.u32 %s284, 2
          %s305 = ssub.s32 %s287, 2
          %s306 = sadd.s32 %s304, %s305
          %s307 = sld [smem:[#allocation10 + %s306]]
          %s308 = scalar_lea.smem [#allocation5], %s82
          %309 = sst [smem:[%s308]] %s307
          %s310 = scalar_lea.smem [#allocation6], %s82
          %311 = sst [smem:[%s310]] %s90
        $region55: #{tpu_custom_call.1} parent=46 // pred_fallthru
          _
        %s312 = sadd.s32 %s89, %s287
        %313 = sst [smem:[%s96]] %s312
      $region47: #{tpu_custom_call.1} parent=40 // pred_fallthru
        _
      %s314 = sadd.s32 %s81, 1
      %s315 = sld [smem:[#allocation7]]
    $region41: #{tpu_custom_call.1} parent=1 // loop_footer
      _
    $region42: #{tpu_custom_call.1} parent=1 // loop_footer_branch
      %80 = sbr.rel target = $region38
    $region43: #{tpu_custom_call.1} parent=1 // loop_exit
      _
    %s316 = scalar_lea.smem [#allocation16], 0
    %317 = sst [smem:[%s316]] %s81
    // Predicated region
    $region56: #{tpu_custom_call.1} parent=1 // pred_check
      _
    $region57: #{tpu_custom_call.1} parent=1 // pred_check_branch
      %319 = sbr.rel (0) target = $region59
    $region58: #{tpu_custom_call.1} parent=1 // pred_region
      %s321 = ssub.s32 16, 16
      %322 = vsyncadd [#allocation12], %s321
      %325 = dma.smem_to_hbm [#allocation11], 16, %s9, [#allocation12]
    $region59: #{tpu_custom_call.1} parent=1 // pred_fallthru
      _
    // Predicated region
    $region60: #{tpu_custom_call.1} parent=1 // pred_check
      _
    $region61: #{tpu_custom_call.1} parent=1 // pred_check_branch
      %327 = sbr.rel (0) target = $region63
    $region62: #{tpu_custom_call.1} parent=1 // pred_region
      %s329 = ssub.s32 16, 16
      %330 = vsyncadd [#allocation14], %s329
      %333 = dma.smem_to_hbm [#allocation13], 16, %s10, [#allocation14]
    $region63: #{tpu_custom_call.1} parent=1 // pred_fallthru
      _
    // Predicated region
    $region64: #{tpu_custom_call.1} parent=1 // pred_check
      _
    $region65: #{tpu_custom_call.1} parent=1 // pred_check_branch
      %335 = sbr.rel (0) target = $region67
    $region66: #{tpu_custom_call.1} parent=1 // pred_region
      %s337 = ssub.s32 16, 16
      %338 = vsyncadd [#allocation14], %s337
      %341 = dma.smem_to_hbm [#allocation15], 16, %s11, [#allocation14]
    $region67: #{tpu_custom_call.1} parent=1 // pred_fallthru
      _
    // Predicated region
    $region68: #{tpu_custom_call.1} parent=1 // pred_check
      _
    $region69: #{tpu_custom_call.1} parent=1 // pred_check_branch
      %343 = sbr.rel (0) target = $region71
    $region70: #{tpu_custom_call.1} parent=1 // pred_region
      %s345 = ssub.s32 16, 16
      %346 = vsyncadd [#allocation17], %s345
      %349 = dma.smem_to_hbm [#allocation16], 16, %s12, [#allocation17]
    $region71: #{tpu_custom_call.1} parent=1 // pred_fallthru
      _
    // Predicated region
    $region72: #{tpu_custom_call.1} parent=1 // pred_check
      _
    $region73: #{tpu_custom_call.1} parent=1 // pred_check_branch
      %351 = sbr.rel (0) target = $region75
    $region74: #{tpu_custom_call.1} parent=1 // pred_region
      %352 = dma.done [#allocation12], 16
    $region75: #{tpu_custom_call.1} parent=1 // pred_fallthru
      _
    // Predicated region
    $region76: #{tpu_custom_call.1} parent=1 // pred_check
      _
    $region77: #{tpu_custom_call.1} parent=1 // pred_check_branch
      %354 = sbr.rel (0) target = $region79
    $region78: #{tpu_custom_call.1} parent=1 // pred_region
      %355 = dma.done [#allocation14], 16
    $region79: #{tpu_custom_call.1} parent=1 // pred_fallthru
      _
    // Predicated region
    $region80: #{tpu_custom_call.1} parent=1 // pred_check
      _
    $region81: #{tpu_custom_call.1} parent=1 // pred_check_branch
      %357 = sbr.rel (0) target = $region83
    $region82: #{tpu_custom_call.1} parent=1 // pred_region
      %358 = dma.done [#allocation14], 16
    $region83: #{tpu_custom_call.1} parent=1 // pred_fallthru
      _
    // Predicated region
    $region84: #{tpu_custom_call.1} parent=1 // pred_check
      _
    $region85: #{tpu_custom_call.1} parent=1 // pred_check_branch
      %360 = sbr.rel (0) target = $region87
    $region86: #{tpu_custom_call.1} parent=1 // pred_region
      %361 = dma.done [#allocation17], 16
    $region87: #{tpu_custom_call.1} parent=1 // pred_fallthru
      _
    %362 = sfence
    %363 = vsyncpa [#allocation12], 1
    %364 = vsyncpa [#allocation14], 1
    %365 = vsyncpa [#allocation17], 1

</llo_original>
